<compile_context>
chip_gen: v7x
topology: tpu7x:2x2x1
jax: 0.10.0
libtpu: 0.0.40
codegen_flags: <defaults>
</compile_context>

<pallas_src>
import jax
import jax.numpy as jnp
from jax.experimental import pallas as pl
from jax.experimental.pallas import tpu as pltpu


# ---------------------------------------------------------------------------
# Kernels
# ---------------------------------------------------------------------------
def _fused_nores_kernel(x_ref, w1_ref, o_ref):
    # o = relu(x @ w1), f32 accumulation on the MXU.
    acc = jnp.dot(x_ref[...], w1_ref[...], preferred_element_type=jnp.float32)
    o_ref[...] = jnp.maximum(acc, 0.0).astype(o_ref.dtype)


def _fused_res_kernel(x_ref, w1_ref, wa_ref, wb_ref, o_ref):
    # fc1 + ReLU (bf16 inputs, f32 accumulate).
    x = jnp.maximum(
        jnp.dot(x_ref[...], w1_ref[...], preferred_element_type=jnp.float32), 0.0
    )
    # Residual chain, statically unrolled (numRes is a compile-time shape).
    # The (tm, M) activation stays on-chip for the whole chain; only the two
    # (tm, M) bf16 casts per block ride the VPU (MXU is the binding unit).
    num_res = wa_ref.shape[0]
    for r in range(num_res):
        h = jnp.maximum(
            jnp.dot(x.astype(jnp.bfloat16), wa_ref[r],
                    preferred_element_type=jnp.float32), 0.0)
        t = jnp.maximum(
            jnp.dot(h.astype(jnp.bfloat16), wb_ref[r],
                    preferred_element_type=jnp.float32), 0.0)
        x = x + t
    o_ref[...] = x.astype(o_ref.dtype)


# ---------------------------------------------------------------------------
# Wrapper: single fused pallas_call over a row grid
# ---------------------------------------------------------------------------
_VMEM_BUDGET = 48 << 20  # stay well under the 64 MiB v7x per-TC VMEM


def _tile_bytes(tm, c, m):
    # Double-buffered bf16 input tile + double-buffered f32 output tile +
    # live f32 intermediates (x, h, t) + bf16 cast shadows inside the body.
    return 2 * (tm * c * 2 + tm * m * 4) + 3 * tm * m * 4 + 2 * tm * m * 2


def _pick_row_tile(n, c, m, weight_bytes):
    # Large tiles amortize the ~0.35us per-grid-step overhead, but (a) keep
    # the row grid >= 2 so v7x's two TensorCores both get sharded work and
    # (b) keep resident weights (x2 pipeline buffers) + tiles inside VMEM.
    resident = 2 * weight_bytes
    for tm in (1024, 512, 256, 128):
        if n >= 2 * tm and resident + _tile_bytes(tm, c, m) <= _VMEM_BUDGET:
            return tm
    return 128


def dim_reduction_forward(x, w1_t, wa_stack=None, wb_stack=None, *, tm=None):
    N, C = x.shape
    M = w1_t.shape[1]
    R = 0 if wa_stack is None else wa_stack.shape[0]

    weight_bytes = (C * M + 2 * R * M * M) * 2  # bf16, held VMEM-resident
    if tm is None:
        tm = _pick_row_tile(N, C, M, weight_bytes)

    n_tiles = pl.cdiv(N, tm)
    Np = n_tiles * tm

    xb = x.astype(jnp.bfloat16)
    if Np != N:
        # Zero rows stay zero through relu/matmul/residual; sliced off below.
        xb = jnp.pad(xb, ((0, Np - N), (0, 0)))

    # Advisory cost estimate for XLA's scheduler (true N, not padded).
    flops = 2 * N * C * M + R * 2 * (2 * N * M * M)
    bytes_accessed = N * C * 2 + weight_bytes + N * M * 4
    cost = pl.CostEstimate(flops=flops, transcendentals=0,
                           bytes_accessed=bytes_accessed)

    vmem_limit = int(min(max(2 * weight_bytes + _tile_bytes(tm, C, M) + (4 << 20),
                             32 << 20),
                         64 << 20))
    # TODO(synk): for very deep residual stacks (2*R*M*M bf16 > ~24 MiB on
    # v7x) stream weight pairs per block with pltpu.emit_pipeline instead of
    # holding the whole stack resident.

    if R == 0:
        kernel = _fused_nores_kernel
        in_specs = [
            pl.BlockSpec((tm, C), lambda i: (i, 0)),
            pl.BlockSpec((C, M), lambda i: (0, 0)),
        ]
        args = (xb, w1_t)
    else:
        kernel = _fused_res_kernel
        in_specs = [
            pl.BlockSpec((tm, C), lambda i: (i, 0)),
            pl.BlockSpec((C, M), lambda i: (0, 0)),
            pl.BlockSpec((R, M, M), lambda i: (0, 0, 0)),
            pl.BlockSpec((R, M, M), lambda i: (0, 0, 0)),
        ]
        args = (xb, w1_t, wa_stack, wb_stack)

    out = pl.pallas_call(
        kernel,
        out_shape=jax.ShapeDtypeStruct((Np, M), jnp.float32),
        grid_spec=pltpu.PrefetchScalarGridSpec(
            num_scalar_prefetch=0,
            grid=(n_tiles,),
            in_specs=in_specs,
            out_specs=pl.BlockSpec((tm, M), lambda i: (i, 0)),
        ),
        compiler_params=pltpu.CompilerParams(
            dimension_semantics=("parallel",),
            vmem_limit_bytes=vmem_limit,
        ),
        cost_estimate=cost,
    )(*args)

    return out[:N] if Np != N else out


# ---------------------------------------------------------------------------
# DimReduction module in JAX (params initialized deterministically in-script)
# ---------------------------------------------------------------------------
class DimReduction:
    def __init__(self, n_channels, m_dim=512, numLayer_Res=0, *, key):
        self.numRes = numLayer_Res
        keys = jax.random.split(key, 1 + 2 * max(numLayer_Res, 1))
        # fc1.weight has shape (m_dim, n_channels); store transposed, bf16.
        w1 = jax.random.normal(keys[0], (m_dim, n_channels), jnp.float32)
        w1 = w1 * (1.0 / jnp.sqrt(n_channels))
        self.fc1_wT = w1.T.astype(jnp.bfloat16)           # (C, M)
        if numLayer_Res > 0:
            scale = 1.0 / jnp.sqrt(m_dim)
            was, wbs = [], []
            for ii in range(numLayer_Res):
                wa = jax.random.normal(keys[1 + 2 * ii], (m_dim, m_dim),
                                       jnp.float32) * scale
                wb = jax.random.normal(keys[2 + 2 * ii], (m_dim, m_dim),
                                       jnp.float32) * scale
                was.append(wa.T)
                wbs.append(wb.T)
            self.wa_stack = jnp.stack(was).astype(jnp.bfloat16)   # (R, M, M)
            self.wb_stack = jnp.stack(wbs).astype(jnp.bfloat16)   # (R, M, M)
        else:
            self.wa_stack = None
            self.wb_stack = None

    def __call__(self, x):
        return dim_reduction_forward(x, self.fc1_wT, self.wa_stack, self.wb_stack)

    def reference(self, x):
        # Pure-JAX reference mirroring the kernel numerics (bf16 matmul inputs,
        # f32 accumulation, f32 residual add) — same chain as PyTorch forward.
        h = jnp.maximum(
            jnp.dot(x.astype(jnp.bfloat16), self.fc1_wT,
                    preferred_element_type=jnp.float32), 0.0)
        for r in range(self.numRes):
            a = jnp.maximum(
                jnp.dot(h.astype(jnp.bfloat16), self.wa_stack[r],
                        preferred_element_type=jnp.float32), 0.0)
            b = jnp.maximum(
                jnp.dot(a.astype(jnp.bfloat16), self.wb_stack[r],
                        preferred_element_type=jnp.float32), 0.0)
            h = h + b
        return h


# ---------------------------------------------------------------------------
if __name__ == "__main__":
    key = jax.random.PRNGKey(0)
    k_x, k_p = jax.random.split(key)

    # Small, module-consistent shapes; N deliberately NOT a multiple of the
    # row tile to exercise the cdiv + padding path.
    N, n_channels, m_dim, num_res = 250, 64, 128, 2

    x = jax.random.normal(k_x, (N, n_channels), jnp.float32)
    model = DimReduction(n_channels, m_dim=m_dim, numLayer_Res=num_res, key=k_p)

    out = jax.block_until_ready(model(x))
    ref = model.reference(x)
    assert out.shape == (N, m_dim)
    assert jnp.allclose(out, ref, atol=2e-2, rtol=2e-2), "mismatch vs reference"

    # numRes == 0 path (fc1 + ReLU only).
    model0 = DimReduction(n_channels, m_dim=m_dim, numLayer_Res=0, key=k_p)
    out0 = jax.block_until_ready(model0(x))
    ref0 = model0.reference(x)
    assert out0.shape == (N, m_dim)
    assert jnp.allclose(out0, ref0, atol=2e-2, rtol=2e-2), \
        "mismatch vs reference (numRes=0)"

    print("KERNEL_OK")
</pallas_src>

<mosaic_0001>
module attributes {stable_mosaic.version = 11 : i64} {
  func.func @_fused_res_kernel(%arg0: i32, %arg1: memref<128x64xbf16, #tpu.memory_space<vmem>>, %arg2: memref<64x128xbf16, #tpu.memory_space<vmem>>, %arg3: memref<2x128x128xbf16, #tpu.memory_space<vmem>>, %arg4: memref<2x128x128xbf16, #tpu.memory_space<vmem>>, %arg5: memref<128x128xf32, #tpu.memory_space<vmem>>) attributes {dimension_semantics = [#tpu.dimension_semantics<parallel>], iteration_bounds = array<i64: 2>, scalar_prefetch = 0 : i64, scratch_operands = 0 : i64, tpu.core_type = #tpu.core_type<tc>, window_params = [{transform_indices = @transform_0, window_bounds = array<i64: 128, 64>}, {pipeline_mode = #tpu.pipeline_mode<synchronous>, transform_indices = @transform_1, window_bounds = array<i64: 64, 128>}, {pipeline_mode = #tpu.pipeline_mode<synchronous>, transform_indices = @transform_2, window_bounds = array<i64: 2, 128, 128>}, {pipeline_mode = #tpu.pipeline_mode<synchronous>, transform_indices = @transform_3, window_bounds = array<i64: 2, 128, 128>}, {transform_indices = @transform_4, window_bounds = array<i64: 128, 128>}]} {
    %c0 = arith.constant 0 : index
    %c0_0 = arith.constant 0 : index
    %0 = vector.load %arg1[%c0, %c0_0] : memref<128x64xbf16, #tpu.memory_space<vmem>>, vector<128x64xbf16>
    %c0_1 = arith.constant 0 : index
    %c0_2 = arith.constant 0 : index
    %1 = vector.load %arg2[%c0_1, %c0_2] : memref<64x128xbf16, #tpu.memory_space<vmem>>, vector<64x128xbf16>
    %cst = arith.constant dense<0.000000e+00> : vector<128x128xf32>
    %2 = tpu.matmul %0, %1, %cst {dimension_numbers = #tpu.dot_dimension_numbers<[1], [0], [0], [1], [0, 0, 1, 1], [], []>} : vector<128x64xbf16>, vector<64x128xbf16>, vector<128x128xf32> -> vector<128x128xf32>
    %cst_3 = arith.constant 0.000000e+00 : f32
    %3 = vector.broadcast %cst_3 : f32 to vector<128x128xf32>
    %4 = arith.maximumf %2, %3 : vector<128x128xf32>
    %5 = arith.truncf %4 : vector<128x128xf32> to vector<128x128xbf16>
    %c0_4 = arith.constant 0 : index
    %c0_5 = arith.constant 0 : index
    %c0_6 = arith.constant 0 : index
    %6 = vector.load %arg3[%c0_4, %c0_5, %c0_6] : memref<2x128x128xbf16, #tpu.memory_space<vmem>>, vector<1x128x128xbf16>
    %7 = vector.shape_cast %6 : vector<1x128x128xbf16> to vector<128x128xbf16>
    %cst_7 = arith.constant dense<0.000000e+00> : vector<128x128xf32>
    %8 = tpu.matmul %5, %7, %cst_7 {dimension_numbers = #tpu.dot_dimension_numbers<[1], [0], [0], [1], [0, 0, 1, 1], [], []>} : vector<128x128xbf16>, vector<128x128xbf16>, vector<128x128xf32> -> vector<128x128xf32>
    %cst_8 = arith.constant 0.000000e+00 : f32
    %9 = vector.broadcast %cst_8 : f32 to vector<128x128xf32>
    %10 = arith.maximumf %8, %9 : vector<128x128xf32>
    %11 = arith.truncf %10 : vector<128x128xf32> to vector<128x128xbf16>
    %c0_9 = arith.constant 0 : index
    %c0_10 = arith.constant 0 : index
    %c0_11 = arith.constant 0 : index
    %12 = vector.load %arg4[%c0_9, %c0_10, %c0_11] : memref<2x128x128xbf16, #tpu.memory_space<vmem>>, vector<1x128x128xbf16>
    %13 = vector.shape_cast %12 : vector<1x128x128xbf16> to vector<128x128xbf16>
    %cst_12 = arith.constant dense<0.000000e+00> : vector<128x128xf32>
    %14 = tpu.matmul %11, %13, %cst_12 {dimension_numbers = #tpu.dot_dimension_numbers<[1], [0], [0], [1], [0, 0, 1, 1], [], []>} : vector<128x128xbf16>, vector<128x128xbf16>, vector<128x128xf32> -> vector<128x128xf32>
    %cst_13 = arith.constant 0.000000e+00 : f32
    %15 = vector.broadcast %cst_13 : f32 to vector<128x128xf32>
    %16 = arith.maximumf %14, %15 : vector<128x128xf32>
    %17 = arith.addf %4, %16 : vector<128x128xf32>
    %18 = arith.truncf %17 : vector<128x128xf32> to vector<128x128xbf16>
    %c1 = arith.constant 1 : index
    %c0_14 = arith.constant 0 : index
    %c0_15 = arith.constant 0 : index
    %19 = vector.load %arg3[%c1, %c0_14, %c0_15] : memref<2x128x128xbf16, #tpu.memory_space<vmem>>, vector<1x128x128xbf16>
    %20 = vector.shape_cast %19 : vector<1x128x128xbf16> to vector<128x128xbf16>
    %cst_16 = arith.constant dense<0.000000e+00> : vector<128x128xf32>
    %21 = tpu.matmul %18, %20, %cst_16 {dimension_numbers = #tpu.dot_dimension_numbers<[1], [0], [0], [1], [0, 0, 1, 1], [], []>} : vector<128x128xbf16>, vector<128x128xbf16>, vector<128x128xf32> -> vector<128x128xf32>
    %cst_17 = arith.constant 0.000000e+00 : f32
    %22 = vector.broadcast %cst_17 : f32 to vector<128x128xf32>
    %23 = arith.maximumf %21, %22 : vector<128x128xf32>
    %24 = arith.truncf %23 : vector<128x128xf32> to vector<128x128xbf16>
    %c1_18 = arith.constant 1 : index
    %c0_19 = arith.constant 0 : index
    %c0_20 = arith.constant 0 : index
    %25 = vector.load %arg4[%c1_18, %c0_19, %c0_20] : memref<2x128x128xbf16, #tpu.memory_space<vmem>>, vector<1x128x128xbf16>
    %26 = vector.shape_cast %25 : vector<1x128x128xbf16> to vector<128x128xbf16>
    %cst_21 = arith.constant dense<0.000000e+00> : vector<128x128xf32>
    %27 = tpu.matmul %24, %26, %cst_21 {dimension_numbers = #tpu.dot_dimension_numbers<[1], [0], [0], [1], [0, 0, 1, 1], [], []>} : vector<128x128xbf16>, vector<128x128xbf16>, vector<128x128xf32> -> vector<128x128xf32>
    %cst_22 = arith.constant 0.000000e+00 : f32
    %28 = vector.broadcast %cst_22 : f32 to vector<128x128xf32>
    %29 = arith.maximumf %27, %28 : vector<128x128xf32>
    %30 = arith.addf %17, %29 : vector<128x128xf32>
    %c0_23 = arith.constant 0 : index
    %c0_24 = arith.constant 0 : index
    %31 = vector.load %arg5[%c0_23, %c0_24] : memref<128x128xf32, #tpu.memory_space<vmem>>, vector<128x128xf32>
    tpu.vector_store %arg5[%c0_23, %c0_24], %30 {strides = array<i32>} : memref<128x128xf32, #tpu.memory_space<vmem>>, vector<128x128xf32>,
    return
  }
  func.func @transform_0(%arg0: i32) -> (i32, i32) {
    %c0_i32 = arith.constant 0 : i32
    %c0_i32_0 = arith.constant 0 : i32
    return %arg0, %c0_i32 : i32, i32
  }
  func.func @transform_1(%arg0: i32) -> (i32, i32) {
    %c0_i32 = arith.constant 0 : i32
    %c0_i32_0 = arith.constant 0 : i32
    %c0_i32_1 = arith.constant 0 : i32
    return %c0_i32, %c0_i32_0 : i32, i32
  }
  func.func @transform_2(%arg0: i32) -> (i32, i32, i32) {
    %c0_i32 = arith.constant 0 : i32
    %c0_i32_0 = arith.constant 0 : i32
    %c0_i32_1 = arith.constant 0 : i32
    %c0_i32_2 = arith.constant 0 : i32
    return %c0_i32, %c0_i32_0, %c0_i32_1 : i32, i32, i32
  }
  func.func @transform_3(%arg0: i32) -> (i32, i32, i32) {
    %c0_i32 = arith.constant 0 : i32
    %c0_i32_0 = arith.constant 0 : i32
    %c0_i32_1 = arith.constant 0 : i32
    %c0_i32_2 = arith.constant 0 : i32
    return %c0_i32, %c0_i32_0, %c0_i32_1 : i32, i32, i32
  }
  func.func @transform_4(%arg0: i32) -> (i32, i32) {
    %c0_i32 = arith.constant 0 : i32
    %c0_i32_0 = arith.constant 0 : i32
    return %arg0, %c0_i32 : i32, i32
  }
}

</mosaic_0001>

<llo_original>
// kernel: tpu_custom_call.1
$region0: #{tpu_custom_call.1}
  #allocation0 [shape = 'u32[]', space=smem, size = 0x4, offset = 0x4, fixed_abs, tag = 'smem constant byte address 0x4 - core index']
  #allocation1 [shape = 'u32[144,128]{1,0:T(1,128)}', space=vmem, size = 0x12000, scoped, tag = 'internal scratch']
  %s0 = inlined_call_operand.vmem [shape: bf16[256,64], index: 0, kind: input, shape index: {}]
  %s1 = inlined_call_operand.vmem [shape: bf16[64,128], index: 1, kind: input, shape index: {}]
  %s2 = inlined_call_operand.vmem [shape: bf16[2,128,128], index: 2, kind: input, shape index: {}]
  %s3 = inlined_call_operand.hbm [shape: bf16[2,128,128], index: 3, kind: input, shape index: {}]
  %s4 = inlined_call_operand.hbm [shape: f32[256,128], index: 4, kind: output, shape index: {}]
  %s5 = sld [smem:[#allocation0]]
  $region53: #{tpu_custom_call.1} parent=0
    _
  %s7 = ssub.s32 1, %s5
  %s8 = scalar_select 0, %s7, %s5
  $region1: #{tpu_custom_call.1} parent=0
    #allocation2 [shape = 'u8[65536]{0}', space=vmem, size = 0x10000, scoped, tag = 'input window, operand 3, single buffered']
    #allocation3 [shape = 's32[2]{0}', space=sflag, size = 0x8, scoped, tag = 'scoped memory for tpu_custom_call.1']
    #allocation4 [shape = 's32[2]{0}', space=sflag, size = 0x8, scoped, tag = 'scoped memory for tpu_custom_call.1']
    #allocation5 [shape = 'u8[131072]{0}', space=vmem, size = 0x20000, scoped, tag = 'output window, operand 0']
    %9 = vsyncpa [#allocation3], 0
    %10 = vsyncpa [#allocation4], 0
    %s11 = scalar_lea.sflag [#allocation4], 1
    %12 = vsyncpa %s11, 0
    loop: start=0, step=1, limit=4
    $region2: #{tpu_custom_call.1} parent=1 // loop_pre_header
      _
    $region3: #{tpu_custom_call.1} parent=1 // loop_header
      %s14 = sphi 0, %s18
      %p15 = scmp.ge.s32.totalorder %s14, 4
      %s24 = sphi 0, %s26
      %s27 = sphi 0, %s24
      %s28 = sphi 0, %s27
      %s44 = sphi 0, %s28
      %s48 = sphi 0, %s48
      %s50 = sphi 0, %s48
      %s51 = sphi 0, %s50
      %s65 = sphi 0, %s51
      %s69 = sphi 0, %s69
      %s71 = sphi 0, %s69
      %s72 = sphi 0, %s71
      %s86 = sphi 0, %s72
      %s90 = sphi 0, %s90
      %s92 = sphi 0, %s90
      %s93 = sphi 0, %s92
      %s107 = sphi 0, %s93
      %s113 = sphi 0, %s115
      %s116 = sphi 0, %s113
      %s117 = sphi 0, %s116
      %s133 = sphi 0, %s117
    $region4: #{tpu_custom_call.1} parent=1 // loop_header_branch
      %17 = sbr.rel (%p15) target = $region8
    $region5: #{tpu_custom_call.1} parent=1 // loop_body
      %s19 = ssub.s32 %s14, 1
      %s20 = ssub.s32 %s14, 2
      %s21 = sadd.s32 %s14, 1
      %s22 = ssub.s32 %s14, %s21
      %p23 = scmp.eq.s32.totalorder %s22, 0
      %s25 = sadd.s32 %s24, 1
      %s26 = scalar_select %p23, %s24, %s25
      %p29 = pneg %p23
      %p30 = scmp.eq.s32.totalorder %s14, 1
      %p31 = por %p29, %p30
      %p32 = scmp.ne.s32.totalorder %s24, %s27
      %p33 = scmp.eq.s32.totalorder %s14, 0
      %p34 = por %p32, %p33
      %p35 = scmp.ne.s32.totalorder %s24, %s27
      %p36 = scmp.eq.s32.totalorder %s19, 1
      %p37 = por %p35, %p36
      %p38 = scmp.ne.s32.totalorder %s27, %s28
      %p39 = scmp.eq.s32.totalorder %s19, 0
      %p40 = por %p38, %p39
      %p41 = scmp.ne.s32.totalorder %s27, %s28
      %p42 = scmp.eq.s32.totalorder %s20, 1
      %p43 = por %p41, %p42
      %p45 = scmp.ne.s32.totalorder %s28, %s44
      %p46 = scmp.eq.s32.totalorder %s20, 0
      %p47 = por %p45, %p46
      %s49 = sadd.s32 %s48, 1
      %p52 = scmp.eq.s32.totalorder %s14, 1
      %p53 = scmp.ne.s32.totalorder %s48, %s50
      %p54 = scmp.eq.s32.totalorder %s14, 0
      %p55 = por %p53, %p54
      %p56 = scmp.ne.s32.totalorder %s48, %s50
      %p57 = scmp.eq.s32.totalorder %s19, 1
      %p58 = por %p56, %p57
      %p59 = scmp.ne.s32.totalorder %s50, %s51
      %p60 = scmp.eq.s32.totalorder %s19, 0
      %p61 = por %p59, %p60
      %p62 = scmp.ne.s32.totalorder %s50, %s51
      %p63 = scmp.eq.s32.totalorder %s20, 1
      %p64 = por %p62, %p63
      %p66 = scmp.ne.s32.totalorder %s51, %s65
      %p67 = scmp.eq.s32.totalorder %s20, 0
      %p68 = por %p66, %p67
      %s70 = sadd.s32 %s69, 1
      %p73 = scmp.eq.s32.totalorder %s14, 1
      %p74 = scmp.ne.s32.totalorder %s69, %s71
      %p75 = scmp.eq.s32.totalorder %s14, 0
      %p76 = por %p74, %p75
      %p77 = scmp.ne.s32.totalorder %s69, %s71
      %p78 = scmp.eq.s32.totalorder %s19, 1
      %p79 = por %p77, %p78
      %p80 = scmp.ne.s32.totalorder %s71, %s72
      %p81 = scmp.eq.s32.totalorder %s19, 0
      %p82 = por %p80, %p81
      %p83 = scmp.ne.s32.totalorder %s71, %s72
      %p84 = scmp.eq.s32.totalorder %s20, 1
      %p85 = por %p83, %p84
      %p87 = scmp.ne.s32.totalorder %s72, %s86
      %p88 = scmp.eq.s32.totalorder %s20, 0
      %p89 = por %p87, %p88
      %s91 = sadd.s32 %s90, 1
      %p94 = scmp.eq.s32.totalorder %s14, 1
      %p95 = scmp.ne.s32.totalorder %s90, %s92
      %p96 = scmp.eq.s32.totalorder %s14, 0
      %p97 = por %p95, %p96
      %p98 = scmp.ne.s32.totalorder %s90, %s92
      %p99 = scmp.eq.s32.totalorder %s19, 1
      %p100 = por %p98, %p99
      %p101 = scmp.ne.s32.totalorder %s92, %s93
      %p102 = scmp.eq.s32.totalorder %s19, 0
      %p103 = por %p101, %p102
      %p104 = scmp.ne.s32.totalorder %s92, %s93
      %p105 = scmp.eq.s32.totalorder %s20, 1
      %p106 = por %p104, %p105
      %p108 = scmp.ne.s32.totalorder %s93, %s107
      %p109 = scmp.eq.s32.totalorder %s20, 0
      %p110 = por %p108, %p109
      %s111 = ssub.s32 %s14, %s21
      %p112 = scmp.eq.s32.totalorder %s111, 0
      %s114 = sadd.s32 %s113, 1
      %s115 = scalar_select %p112, %s113, %s114
      %p118 = pneg %p112
      %p119 = scmp.eq.s32.totalorder %s14, 1
      %p120 = por %p118, %p119
      %p121 = scmp.ne.s32.totalorder %s113, %s116
      %p122 = scmp.eq.s32.totalorder %s14, 0
      %p123 = por %p121, %p122
      %p124 = scmp.ne.s32.totalorder %s113, %s116
      %p125 = scmp.eq.s32.totalorder %s19, 1
      %p126 = por %p124, %p125
      %p127 = scmp.ne.s32.totalorder %s116, %s117
      %p128 = scmp.eq.s32.totalorder %s19, 0
      %p129 = por %p127, %p128
      %p130 = scmp.ne.s32.totalorder %s116, %s117
      %p131 = scmp.eq.s32.totalorder %s20, 1
      %p132 = por %p130, %p131
      %p134 = scmp.ne.s32.totalorder %s117, %s133
      %p135 = scmp.eq.s32.totalorder %s20, 0
      %p136 = por %p134, %p135
      %p137 = scmp.le.s32.totalorder 1, %s14
      %p138 = scmp.lt.s32.totalorder %s14, 3
      %p139 = pnand %p137, %p138
      %p140 = pneg %p139
      // Predicated region
      $region9: #{tpu_custom_call.1} parent=5 // pred_check
        _
      $region10: #{tpu_custom_call.1} parent=5 // pred_check_branch
        %142 = sbr.rel (%p139) target = $region12
      $region11: #{tpu_custom_call.1} parent=5 // pred_region
        %s143 = ssub.s32 %s14, 1
        // Predicated region
        $region13: #{tpu_custom_call.1} parent=11 // pred_check
          %p144 = pneg %p61
        $region14: #{tpu_custom_call.1} parent=11 // pred_check_branch
          %146 = sbr.rel (%p144) target = $region16
        $region15: #{tpu_custom_call.1} parent=11 // pred_region
          _
        $region16: #{tpu_custom_call.1} parent=11 // pred_fallthru
          _
        // Predicated region
        $region17: #{tpu_custom_call.1} parent=11 // pred_check
          %p147 = pneg %p82
        $region18: #{tpu_custom_call.1} parent=11 // pred_check_branch
          %149 = sbr.rel (%p147) target = $region20
        $region19: #{tpu_custom_call.1} parent=11 // pred_region
          _
        $region20: #{tpu_custom_call.1} parent=11 // pred_fallthru
          _
        // Predicated region
        $region21: #{tpu_custom_call.1} parent=11 // pred_check
          %p150 = pneg %p103
        $region22: #{tpu_custom_call.1} parent=11 // pred_check_branch
          %152 = sbr.rel (%p150) target = $region24
        $region23: #{tpu_custom_call.1} parent=11 // pred_region
          %s154 = ssub.s32 2048, 2048
          %155 = vsyncadd [#allocation3], %s154
          %s156 = sshll.u32 [#allocation2], 4
          %s157 = int_to_ptr.vmem [resolvable:$true] %s156
          %162 = dma.hbm_to_vmem [thread:$0]  %s3, 2048, %s157, [#allocation3], 64, 64, 4
        $region24: #{tpu_custom_call.1} parent=11 // pred_fallthru
          _
      $region12: #{tpu_custom_call.1} parent=5 // pred_fallthru
        _
      %p163 = scmp.lt.s32.totalorder %s14, 2
      // Predicated region
      $region25: #{tpu_custom_call.1} parent=5 // pred_check
        %p164 = pneg %p163
      $region26: #{tpu_custom_call.1} parent=5 // pred_check_branch
        %166 = sbr.rel (%p164) target = $region28
      $region27: #{tpu_custom_call.1} parent=5 // pred_region
        // Predicated region
        $region29: #{tpu_custom_call.1} parent=27 // pred_check
          %p167 = pneg %p34
        $region30: #{tpu_custom_call.1} parent=27 // pred_check_branch
          %169 = sbr.rel (%p167) target = $region32
        $region31: #{tpu_custom_call.1} parent=27 // pred_region
          %s170 = smul.u32 16, %s14
          %p171 = scmp.lt.s32.totalorder %s170, 31
          %s172 = scalar_select %p171, %s170, 31
          %s173 = smul.addr %s172, 4
          %s174 = scalar_lea.vmem %s0, %s173
          %s175 = smul.u32 16, %s14
        $region32: #{tpu_custom_call.1} parent=27 // pred_fallthru
          _
      $region28: #{tpu_custom_call.1} parent=5 // pred_fallthru
        _
      %p176 = scmp.le.s32.totalorder 1, %s14
      %p177 = scmp.lt.s32.totalorder %s14, 3
      %p178 = pnand %p176, %p177
      %p179 = pneg %p178
      // Predicated region
      $region33: #{tpu_custom_call.1} parent=5 // pred_check
        _
      $region34: #{tpu_custom_call.1} parent=5 // pred_check_branch
        %181 = sbr.rel (%p178) target = $region36
      $region35: #{tpu_custom_call.1} parent=5 // pred_region
        %s182 = ssub.s32 %s14, 1
        // Predicated region
        $region37: #{tpu_custom_call.1} parent=35 // pred_check
          %p183 = pneg %p103
        $region38: #{tpu_custom_call.1} parent=35 // pred_check_branch
          %185 = sbr.rel (%p183) target = $region40
        $region39: #{tpu_custom_call.1} parent=35 // pred_region
          %186 = dma.done [#allocation3], 2048
        $region40: #{tpu_custom_call.1} parent=35 // pred_fallthru
          _
        %s187 = smul.u32 16, %s19
        %p188 = scmp.lt.s32.totalorder %s187, 31
        %s189 = scalar_select %p188, %s187, 31
        %s190 = smul.addr %s189, 4
        %s191 = scalar_lea.vmem %s0, %s190
        %p192 = pneg %p40
        %p193 = pneg %p37
        %p194 = pneg %p61
        %p195 = pneg %p58
        %p196 = pneg %p82
        %p197 = pneg %p79
        %p198 = pneg %p103
        %p199 = pneg %p100
        %p200 = pneg %p129
        %p201 = pneg %p126
        %s202 = sand.u32 %s116, 1
        %s203 = scalar_lea.sflag [#allocation4], %s202
        %s204 = sand.u32 %s116, 1
        %s205 = smul.addr %s204, 128
        %s206 = scalar_lea.vmem [#allocation5], %s205
        %s207 = smul.u32 16, %s19
        %p208 = scmp.lt.s32.totalorder %s207, 31
        %s209 = scalar_select %p208, %s207, 31
        %s210 = smul.addr %s209, 4
        %s211 = scalar_lea.vmem %s0, %s210
        %s212 = smul.u32 16, %s19
        %s213 = smul.u32 16, %s19
        %v215 = vld [vmem:[%s211] sm:$0xf]
        %v216 = vld [vmem:[%s211 + $0x4] sm:$0xf]
        %v217 = vld [vmem:[%s211 + $0x8] sm:$0xf]
        %v218 = vld [vmem:[%s211 + $0xc] sm:$0xf]
        %v219 = vld [vmem:[%s211 + $0x10] sm:$0xf]
        %v220 = vld [vmem:[%s211 + $0x14] sm:$0xf]
        %v221 = vld [vmem:[%s211 + $0x18] sm:$0xf]
        %v222 = vld [vmem:[%s211 + $0x1c] sm:$0xf]
        %v223 = vld [vmem:[%s211 + $0x20] sm:$0xf]
        %v224 = vld [vmem:[%s211 + $0x24] sm:$0xf]
        %v225 = vld [vmem:[%s211 + $0x28] sm:$0xf]
        %v226 = vld [vmem:[%s211 + $0x2c] sm:$0xf]
        %v227 = vld [vmem:[%s211 + $0x30] sm:$0xf]
        %v228 = vld [vmem:[%s211 + $0x34] sm:$0xf]
        %v229 = vld [vmem:[%s211 + $0x38] sm:$0xf]
        %v230 = vld [vmem:[%s211 + $0x3c] sm:$0xf]
        %v231 = vld [vmem:[%s1] sm:$0xf]
        %v232 = vld [vmem:[%s1 + $0x4] sm:$0xf]
        %v233 = vld [vmem:[%s1 + $0x8] sm:$0xf]
        %v234 = vld [vmem:[%s1 + $0xc] sm:$0xf]
        %v235 = vld [vmem:[%s1 + $0x10] sm:$0xf]
        %v236 = vld [vmem:[%s1 + $0x14] sm:$0xf]
        %v237 = vld [vmem:[%s1 + $0x18] sm:$0xf]
        %v238 = vld [vmem:[%s1 + $0x1c] sm:$0xf]
        %v255 = vunpack.c.l.b16 %v215
        %v256 = vunpack.c.l.b16 %v216
        %v257 = vunpack.c.l.b16 %v217
        %v258 = vunpack.c.l.b16 %v218
        %v259 = vunpack.c.l.b16 %v219
        %v260 = vunpack.c.l.b16 %v220
        %v261 = vunpack.c.l.b16 %v221
        %v262 = vunpack.c.l.b16 %v222
        %v263 = vunpack.c.l.b16 %v223
        %v264 = vunpack.c.l.b16 %v224
        %v265 = vunpack.c.l.b16 %v225
        %v266 = vunpack.c.l.b16 %v226
        %v267 = vunpack.c.l.b16 %v227
        %v268 = vunpack.c.l.b16 %v228
        %v269 = vunpack.c.l.b16 %v229
        %v270 = vunpack.c.l.b16 %v230
        %v271 = vpack.c.b16 %v256, %v255
        %v272 = vpack.c.b16 %v258, %v257
        %v273 = vpack.c.b16 %v260, %v259
        %v274 = vpack.c.b16 %v262, %v261
        %v275 = vpack.c.b16 %v264, %v263
        %v276 = vpack.c.b16 %v266, %v265
        %v277 = vpack.c.b16 %v268, %v267
        %v278 = vpack.c.b16 %v270, %v269
        %v287 = vunpack.c.l.b16 %v231
        %v288 = vunpack.c.l.b16 %v232
        %v289 = vunpack.c.l.b16 %v233
        %v290 = vunpack.c.l.b16 %v234
        %v291 = vunpack.c.l.b16 %v235
        %v292 = vunpack.c.l.b16 %v236
        %v293 = vunpack.c.l.b16 %v237
        %v294 = vunpack.c.l.b16 %v238
        %v295 = vpack.c.b16 %v288, %v287
        %v296 = vpack.c.b16 %v290, %v289
        %v297 = vpack.c.b16 %v292, %v291
        %v298 = vpack.c.b16 %v294, %v293
        %vm303 = vcmask 523264
        %v305 = vsel %vm303, %v271, 0
        %v308 = vsel %vm303, %v272, 0
        %v311 = vsel %vm303, %v273, 0
        %v314 = vsel %vm303, %v274, 0
        %v317 = vsel %vm303, %v275, 0
        %v320 = vsel %vm303, %v276, 0
        %v323 = vsel %vm303, %v277, 0
        %v326 = vsel %vm303, %v278, 0
        %328 = vmatprep.subr.bf16.mxu0 0
        %329 = vmatpush1.bf16.msra.mxu0 %v295
        %330 = vmatprep.subr.bf16.mxu0 0
        %331 = vmatpush1.bf16.msra.mxu0 %v296
        %332 = vmatprep.subr.bf16.mxu0 0
        %333 = vmatpush1.bf16.msra.mxu0 %v297
        %334 = vmatprep.subr.bf16.mxu0 0
        %335 = vmatpush1.bf16.msra.mxu0 %v298
        %336 = vmatprep.subr.bf16.mxu0 0
        %337 = vmatpush1.bf16.msra.mxu0 0
        %338 = vmatprep.subr.bf16.mxu0 0
        %339 = vmatpush1.bf16.msra.mxu0 0
        %340 = vmatprep.subr.bf16.mxu0 0
        %341 = vmatpush1.bf16.msra.mxu0 0
        %342 = vmatprep.subr.bf16.mxu0 0
        %343 = vmatpush1.bf16.msra.mxu0 0
        %344 = vmatprep.subr.bf16.mxu0 0
        %345 = vmatpush1.bf16.msra.mxu0 0
        %346 = vmatprep.subr.bf16.mxu0 0
        %347 = vmatpush1.bf16.msra.mxu0 0
        %348 = vmatprep.subr.bf16.mxu0 0
        %349 = vmatpush1.bf16.msra.mxu0 0
        %350 = vmatprep.subr.bf16.mxu0 0
        %351 = vmatpush1.bf16.msra.mxu0 0
        %352 = vmatprep.subr.bf16.mxu0 0
        %353 = vmatpush1.bf16.msra.mxu0 0
        %354 = vmatprep.subr.bf16.mxu0 0
        %355 = vmatpush1.bf16.msra.mxu0 0
        %356 = vmatprep.subr.bf16.mxu0 0
        %357 = vmatpush1.bf16.msra.mxu0 0
        %358 = vmatprep.subr.bf16.mxu0 0
        %359 = vmatpush1.bf16.msra.mxu0 0
        %360 = vmatprep.mubr.bf16.mxu0 0
        %361 = vmatmul.mubr.bf16.gmra.mrb[0].mxu0 %v305
        %v362 = vpop.f32.mrb[0].mxu0
        %v363 = vadd.f32 0.0, %v362
        %v364 = vpop.f32.mrb[0].mxu0
        %v365 = vpop.f32.mrb[0].mxu0
        %v366 = vadd.f32 0.0, %v365
        %v367 = vpop.f32.mrb[0].mxu0
        %368 = vmatprep.mubr.bf16.mxu0 0
        %369 = vmatmul.mubr.bf16.gmra.mrb[0].mxu0 %v308
        %v370 = vpop.f32.mrb[0].mxu0
        %v371 = vadd.f32 0.0, %v370
        %v372 = vpop.f32.mrb[0].mxu0
        %v373 = vpop.f32.mrb[0].mxu0
        %v374 = vadd.f32 0.0, %v373
        %v375 = vpop.f32.mrb[0].mxu0
        %376 = vmatprep.mubr.bf16.mxu0 0
        %377 = vmatmul.mubr.bf16.gmra.mrb[0].mxu0 %v311
        %v378 = vpop.f32.mrb[0].mxu0
        %v379 = vadd.f32 0.0, %v378
        %v380 = vpop.f32.mrb[0].mxu0
        %v381 = vpop.f32.mrb[0].mxu0
        %v382 = vadd.f32 0.0, %v381
        %v383 = vpop.f32.mrb[0].mxu0
        %384 = vmatprep.mubr.bf16.mxu0 0
        %385 = vmatmul.mubr.bf16.gmra.mrb[0].mxu0 %v314
        %v386 = vpop.f32.mrb[0].mxu0
        %v387 = vadd.f32 0.0, %v386
        %v388 = vpop.f32.mrb[0].mxu0
        %v389 = vpop.f32.mrb[0].mxu0
        %v390 = vadd.f32 0.0, %v389
        %v391 = vpop.f32.mrb[0].mxu0
        %392 = vmatprep.mubr.bf16.mxu0 0
        %393 = vmatmul.mubr.bf16.gmra.mrb[0].mxu0 %v317
        %v394 = vpop.f32.mrb[0].mxu0
        %v395 = vadd.f32 0.0, %v394
        %v396 = vpop.f32.mrb[0].mxu0
        %v397 = vpop.f32.mrb[0].mxu0
        %v398 = vadd.f32 0.0, %v397
        %v399 = vpop.f32.mrb[0].mxu0
        %400 = vmatprep.mubr.bf16.mxu0 0
        %401 = vmatmul.mubr.bf16.gmra.mrb[0].mxu0 %v320
        %v402 = vpop.f32.mrb[0].mxu0
        %v403 = vadd.f32 0.0, %v402
        %v404 = vpop.f32.mrb[0].mxu0
        %v405 = vpop.f32.mrb[0].mxu0
        %v406 = vadd.f32 0.0, %v405
        %v407 = vpop.f32.mrb[0].mxu0
        %408 = vmatprep.mubr.bf16.mxu0 0
        %409 = vmatmul.mubr.bf16.gmra.mrb[0].mxu0 %v323
        %v410 = vpop.f32.mrb[0].mxu0
        %v411 = vadd.f32 0.0, %v410
        %v412 = vpop.f32.mrb[0].mxu0
        %v413 = vpop.f32.mrb[0].mxu0
        %v414 = vadd.f32 0.0, %v413
        %v415 = vpop.f32.mrb[0].mxu0
        %416 = vmatprep.mubr.bf16.mxu0 0
        %417 = vmatmul.mubr.bf16.gmra.mrb[0].mxu0 %v326
        %v418 = vpop.f32.mrb[0].mxu0
        %v419 = vadd.f32 0.0, %v418
        %v420 = vpop.f32.mrb[0].mxu0
        %v421 = vpop.f32.mrb[0].mxu0
        %v422 = vadd.f32 0.0, %v421
        %v423 = vpop.f32.mrb[0].mxu0
        %424 = vdwg.mxu0
        %v425 = vmax.f32 %v363, 0.0
        %v426 = vmax.f32 %v366, 0.0
        %v427 = vmax.f32 %v371, 0.0
        %v428 = vmax.f32 %v374, 0.0
        %v429 = vmax.f32 %v379, 0.0
        %v430 = vmax.f32 %v382, 0.0
        %v431 = vmax.f32 %v387, 0.0
        %v432 = vmax.f32 %v390, 0.0
        %v433 = vmax.f32 %v395, 0.0
        %v434 = vmax.f32 %v398, 0.0
        %v435 = vmax.f32 %v403, 0.0
        %v436 = vmax.f32 %v406, 0.0
        %v437 = vmax.f32 %v411, 0.0
        %v438 = vmax.f32 %v414, 0.0
        %v439 = vmax.f32 %v419, 0.0
        %v440 = vmax.f32 %v422, 0.0
        %v441 = vpack.c.bf16 %v426, %v425
        %v442 = vpack.c.bf16 %v428, %v427
        %v443 = vpack.c.bf16 %v430, %v429
        %v444 = vpack.c.bf16 %v432, %v431
        %v445 = vpack.c.bf16 %v434, %v433
        %v446 = vpack.c.bf16 %v436, %v435
        %v447 = vpack.c.bf16 %v438, %v437
        %v448 = vpack.c.bf16 %v440, %v439
        %v449 = vld [vmem:[%s2] sm:$0xf]
        %v450 = vld [vmem:[%s2 + $0x4] sm:$0xf]
        %v451 = vld [vmem:[%s2 + $0x8] sm:$0xf]
        %v452 = vld [vmem:[%s2 + $0xc] sm:$0xf]
        %v453 = vld [vmem:[%s2 + $0x10] sm:$0xf]
        %v454 = vld [vmem:[%s2 + $0x14] sm:$0xf]
        %v455 = vld [vmem:[%s2 + $0x18] sm:$0xf]
        %v456 = vld [vmem:[%s2 + $0x1c] sm:$0xf]
        %v457 = vld [vmem:[%s2 + $0x20] sm:$0xf]
        %v458 = vld [vmem:[%s2 + $0x24] sm:$0xf]
        %v459 = vld [vmem:[%s2 + $0x28] sm:$0xf]
        %v460 = vld [vmem:[%s2 + $0x2c] sm:$0xf]
        %v461 = vld [vmem:[%s2 + $0x30] sm:$0xf]
        %v462 = vld [vmem:[%s2 + $0x34] sm:$0xf]
        %v463 = vld [vmem:[%s2 + $0x38] sm:$0xf]
        %v464 = vld [vmem:[%s2 + $0x3c] sm:$0xf]
        %v481 = vunpack.c.l.b16 %v449
        %v482 = vunpack.c.l.b16 %v450
        %v483 = vunpack.c.l.b16 %v451
        %v484 = vunpack.c.l.b16 %v452
        %v485 = vunpack.c.l.b16 %v453
        %v486 = vunpack.c.l.b16 %v454
        %v487 = vunpack.c.l.b16 %v455
        %v488 = vunpack.c.l.b16 %v456
        %v489 = vunpack.c.l.b16 %v457
        %v490 = vunpack.c.l.b16 %v458
        %v491 = vunpack.c.l.b16 %v459
        %v492 = vunpack.c.l.b16 %v460
        %v493 = vunpack.c.l.b16 %v461
        %v494 = vunpack.c.l.b16 %v462
        %v495 = vunpack.c.l.b16 %v463
        %v496 = vunpack.c.l.b16 %v464
        %v497 = vpack.c.b16 %v482, %v481
        %v498 = vpack.c.b16 %v484, %v483
        %v499 = vpack.c.b16 %v486, %v485
        %v500 = vpack.c.b16 %v488, %v487
        %v501 = vpack.c.b16 %v490, %v489
        %v502 = vpack.c.b16 %v492, %v491
        %v503 = vpack.c.b16 %v494, %v493
        %v504 = vpack.c.b16 %v496, %v495
        %513 = vmatprep.subr.bf16.mxu0 0
        %514 = vmatpush1.bf16.msra.mxu0 %v497
        %515 = vmatprep.subr.bf16.mxu0 0
        %516 = vmatpush1.bf16.msra.mxu0 %v498
        %517 = vmatprep.subr.bf16.mxu0 0
        %518 = vmatpush1.bf16.msra.mxu0 %v499
        %519 = vmatprep.subr.bf16.mxu0 0
        %520 = vmatpush1.bf16.msra.mxu0 %v500
        %521 = vmatprep.subr.bf16.mxu0 0
        %522 = vmatpush1.bf16.msra.mxu0 %v501
        %523 = vmatprep.subr.bf16.mxu0 0
        %524 = vmatpush1.bf16.msra.mxu0 %v502
        %525 = vmatprep.subr.bf16.mxu0 0
        %526 = vmatpush1.bf16.msra.mxu0 %v503
        %527 = vmatprep.subr.bf16.mxu0 0
        %528 = vmatpush1.bf16.msra.mxu0 %v504
        %529 = vmatprep.subr.bf16.mxu0 0
        %530 = vmatpush1.bf16.msra.mxu0 0
        %531 = vmatprep.subr.bf16.mxu0 0
        %532 = vmatpush1.bf16.msra.mxu0 0
        %533 = vmatprep.subr.bf16.mxu0 0
        %534 = vmatpush1.bf16.msra.mxu0 0
        %535 = vmatprep.subr.bf16.mxu0 0
        %536 = vmatpush1.bf16.msra.mxu0 0
        %537 = vmatprep.subr.bf16.mxu0 0
        %538 = vmatpush1.bf16.msra.mxu0 0
        %539 = vmatprep.subr.bf16.mxu0 0
        %540 = vmatpush1.bf16.msra.mxu0 0
        %541 = vmatprep.subr.bf16.mxu0 0
        %542 = vmatpush1.bf16.msra.mxu0 0
        %543 = vmatprep.subr.bf16.mxu0 0
        %544 = vmatpush1.bf16.msra.mxu0 0
        %545 = vmatprep.mubr.bf16.mxu0 0
        %546 = vmatmul.mubr.bf16.gmra.mrb[0].mxu0 %v441
        %v547 = vpop.f32.mrb[0].mxu0
        %v548 = vadd.f32 0.0, %v547
        %v549 = vpop.f32.mrb[0].mxu0
        %v550 = vpop.f32.mrb[0].mxu0
        %v551 = vadd.f32 0.0, %v550
        %v552 = vpop.f32.mrb[0].mxu0
        %553 = vmatprep.mubr.bf16.mxu0 0
        %554 = vmatmul.mubr.bf16.gmra.mrb[0].mxu0 %v442
        %v555 = vpop.f32.mrb[0].mxu0
        %v556 = vadd.f32 0.0, %v555
        %v557 = vpop.f32.mrb[0].mxu0
        %v558 = vpop.f32.mrb[0].mxu0
        %v559 = vadd.f32 0.0, %v558
        %v560 = vpop.f32.mrb[0].mxu0
        %561 = vmatprep.mubr.bf16.mxu0 0
        %562 = vmatmul.mubr.bf16.gmra.mrb[0].mxu0 %v443
        %v563 = vpop.f32.mrb[0].mxu0
        %v564 = vadd.f32 0.0, %v563
        %v565 = vpop.f32.mrb[0].mxu0
        %v566 = vpop.f32.mrb[0].mxu0
        %v567 = vadd.f32 0.0, %v566
        %v568 = vpop.f32.mrb[0].mxu0
        %569 = vmatprep.mubr.bf16.mxu0 0
        %570 = vmatmul.mubr.bf16.gmra.mrb[0].mxu0 %v444
        %v571 = vpop.f32.mrb[0].mxu0
        %v572 = vadd.f32 0.0, %v571
        %v573 = vpop.f32.mrb[0].mxu0
        %v574 = vpop.f32.mrb[0].mxu0
        %v575 = vadd.f32 0.0, %v574
        %v576 = vpop.f32.mrb[0].mxu0
        %577 = vmatprep.mubr.bf16.mxu0 0
        %578 = vmatmul.mubr.bf16.gmra.mrb[0].mxu0 %v445
        %v579 = vpop.f32.mrb[0].mxu0
        %v580 = vadd.f32 0.0, %v579
        %v581 = vpop.f32.mrb[0].mxu0
        %v582 = vpop.f32.mrb[0].mxu0
        %v583 = vadd.f32 0.0, %v582
        %v584 = vpop.f32.mrb[0].mxu0
        %585 = vmatprep.mubr.bf16.mxu0 0
        %586 = vmatmul.mubr.bf16.gmra.mrb[0].mxu0 %v446
        %v587 = vpop.f32.mrb[0].mxu0
        %v588 = vadd.f32 0.0, %v587
        %v589 = vpop.f32.mrb[0].mxu0
        %v590 = vpop.f32.mrb[0].mxu0
        %v591 = vadd.f32 0.0, %v590
        %v592 = vpop.f32.mrb[0].mxu0
        %593 = vmatprep.mubr.bf16.mxu0 0
        %594 = vmatmul.mubr.bf16.gmra.mrb[0].mxu0 %v447
        %v595 = vpop.f32.mrb[0].mxu0
        %v596 = vadd.f32 0.0, %v595
        %v597 = vpop.f32.mrb[0].mxu0
        %v598 = vpop.f32.mrb[0].mxu0
        %v599 = vadd.f32 0.0, %v598
        %v600 = vpop.f32.mrb[0].mxu0
        %601 = vmatprep.mubr.bf16.mxu0 0
        %602 = vmatmul.mubr.bf16.gmra.mrb[0].mxu0 %v448
        %v603 = vpop.f32.mrb[0].mxu0
        %v604 = vadd.f32 0.0, %v603
        %v605 = vpop.f32.mrb[0].mxu0
        %v606 = vpop.f32.mrb[0].mxu0
        %v607 = vadd.f32 0.0, %v606
        %v608 = vpop.f32.mrb[0].mxu0
        %609 = vdwg.mxu0
        %v610 = vmax.f32 %v548, 0.0
        %v611 = vmax.f32 %v551, 0.0
        %v612 = vmax.f32 %v556, 0.0
        %v613 = vmax.f32 %v559, 0.0
        %v614 = vmax.f32 %v564, 0.0
        %v615 = vmax.f32 %v567, 0.0
        %v616 = vmax.f32 %v572, 0.0
        %v617 = vmax.f32 %v575, 0.0
        %v618 = vmax.f32 %v580, 0.0
        %v619 = vmax.f32 %v583, 0.0
        %v620 = vmax.f32 %v588, 0.0
        %v621 = vmax.f32 %v591, 0.0
        %v622 = vmax.f32 %v596, 0.0
        %v623 = vmax.f32 %v599, 0.0
        %v624 = vmax.f32 %v604, 0.0
        %v625 = vmax.f32 %v607, 0.0
        %v626 = vpack.c.bf16 %v611, %v610
        %v627 = vpack.c.bf16 %v613, %v612
        %v628 = vpack.c.bf16 %v615, %v614
        %v629 = vpack.c.bf16 %v617, %v616
        %v630 = vpack.c.bf16 %v619, %v618
        %v631 = vpack.c.bf16 %v621, %v620
        %v632 = vpack.c.bf16 %v623, %v622
        %v633 = vpack.c.bf16 %v625, %v624
        %v634 = vld [vmem:[#allocation2] sm:$0xf]
        %v635 = vld [vmem:[#allocation2 + $0x4] sm:$0xf]
        %v636 = vld [vmem:[#allocation2 + $0x8] sm:$0xf]
        %v637 = vld [vmem:[#allocation2 + $0xc] sm:$0xf]
        %v638 = vld [vmem:[#allocation2 + $0x10] sm:$0xf]
        %v639 = vld [vmem:[#allocation2 + $0x14] sm:$0xf]
        %v640 = vld [vmem:[#allocation2 + $0x18] sm:$0xf]
        %v641 = vld [vmem:[#allocation2 + $0x1c] sm:$0xf]
        %v642 = vld [vmem:[#allocation2 + $0x20] sm:$0xf]
        %v643 = vld [vmem:[#allocation2 + $0x24] sm:$0xf]
        %v644 = vld [vmem:[#allocation2 + $0x28] sm:$0xf]
        %v645 = vld [vmem:[#allocation2 + $0x2c] sm:$0xf]
        %v646 = vld [vmem:[#allocation2 + $0x30] sm:$0xf]
        %v647 = vld [vmem:[#allocation2 + $0x34] sm:$0xf]
        %v648 = vld [vmem:[#allocation2 + $0x38] sm:$0xf]
        %v649 = vld [vmem:[#allocation2 + $0x3c] sm:$0xf]
        %v666 = vunpack.c.l.b16 %v634
        %v667 = vunpack.c.l.b16 %v635
        %v668 = vunpack.c.l.b16 %v636
        %v669 = vunpack.c.l.b16 %v637
        %v670 = vunpack.c.l.b16 %v638
        %v671 = vunpack.c.l.b16 %v639
        %v672 = vunpack.c.l.b16 %v640
        %v673 = vunpack.c.l.b16 %v641
        %v674 = vunpack.c.l.b16 %v642
        %v675 = vunpack.c.l.b16 %v643
        %v676 = vunpack.c.l.b16 %v644
        %v677 = vunpack.c.l.b16 %v645
        %v678 = vunpack.c.l.b16 %v646
        %v679 = vunpack.c.l.b16 %v647
        %v680 = vunpack.c.l.b16 %v648
        %v681 = vunpack.c.l.b16 %v649
        %v682 = vpack.c.b16 %v667, %v666
        %v683 = vpack.c.b16 %v669, %v668
        %v684 = vpack.c.b16 %v671, %v670
        %v685 = vpack.c.b16 %v673, %v672
        %v686 = vpack.c.b16 %v675, %v674
        %v687 = vpack.c.b16 %v677, %v676
        %v688 = vpack.c.b16 %v679, %v678
        %v689 = vpack.c.b16 %v681, %v680
        %698 = vmatprep.subr.bf16.mxu0 0
        %699 = vmatpush1.bf16.msra.mxu0 %v682
        %700 = vmatprep.subr.bf16.mxu0 0
        %701 = vmatpush1.bf16.msra.mxu0 %v683
        %702 = vmatprep.subr.bf16.mxu0 0
        %703 = vmatpush1.bf16.msra.mxu0 %v684
        %704 = vmatprep.subr.bf16.mxu0 0
        %705 = vmatpush1.bf16.msra.mxu0 %v685
        %706 = vmatprep.subr.bf16.mxu0 0
        %707 = vmatpush1.bf16.msra.mxu0 %v686
        %708 = vmatprep.subr.bf16.mxu0 0
        %709 = vmatpush1.bf16.msra.mxu0 %v687
        %710 = vmatprep.subr.bf16.mxu0 0
        %711 = vmatpush1.bf16.msra.mxu0 %v688
        %712 = vmatprep.subr.bf16.mxu0 0
        %713 = vmatpush1.bf16.msra.mxu0 %v689
        %714 = vmatprep.subr.bf16.mxu0 0
        %715 = vmatpush1.bf16.msra.mxu0 0
        %716 = vmatprep.subr.bf16.mxu0 0
        %717 = vmatpush1.bf16.msra.mxu0 0
        %718 = vmatprep.subr.bf16.mxu0 0
        %719 = vmatpush1.bf16.msra.mxu0 0
        %720 = vmatprep.subr.bf16.mxu0 0
        %721 = vmatpush1.bf16.msra.mxu0 0
        %722 = vmatprep.subr.bf16.mxu0 0
        %723 = vmatpush1.bf16.msra.mxu0 0
        %724 = vmatprep.subr.bf16.mxu0 0
        %725 = vmatpush1.bf16.msra.mxu0 0
        %726 = vmatprep.subr.bf16.mxu0 0
        %727 = vmatpush1.bf16.msra.mxu0 0
        %728 = vmatprep.subr.bf16.mxu0 0
        %729 = vmatpush1.bf16.msra.mxu0 0
        %730 = vmatprep.mubr.bf16.mxu0 0
        %731 = vmatmul.mubr.bf16.gmra.mrb[0].mxu0 %v626
        %v732 = vpop.f32.mrb[0].mxu0
        %v733 = vadd.f32 0.0, %v732
        %v734 = vpop.f32.mrb[0].mxu0
        %v735 = vpop.f32.mrb[0].mxu0
        %v736 = vadd.f32 0.0, %v735
        %v737 = vpop.f32.mrb[0].mxu0
        %738 = vmatprep.mubr.bf16.mxu0 0
        %739 = vmatmul.mubr.bf16.gmra.mrb[0].mxu0 %v627
        %v740 = vpop.f32.mrb[0].mxu0
        %v741 = vadd.f32 0.0, %v740
        %v742 = vpop.f32.mrb[0].mxu0
        %v743 = vpop.f32.mrb[0].mxu0
        %v744 = vadd.f32 0.0, %v743
        %v745 = vpop.f32.mrb[0].mxu0
        %746 = vmatprep.mubr.bf16.mxu0 0
        %747 = vmatmul.mubr.bf16.gmra.mrb[0].mxu0 %v628
        %v748 = vpop.f32.mrb[0].mxu0
        %v749 = vadd.f32 0.0, %v748
        %v750 = vpop.f32.mrb[0].mxu0
        %v751 = vpop.f32.mrb[0].mxu0
        %v752 = vadd.f32 0.0, %v751
        %v753 = vpop.f32.mrb[0].mxu0
        %754 = vmatprep.mubr.bf16.mxu0 0
        %755 = vmatmul.mubr.bf16.gmra.mrb[0].mxu0 %v629
        %v756 = vpop.f32.mrb[0].mxu0
        %v757 = vadd.f32 0.0, %v756
        %v758 = vpop.f32.mrb[0].mxu0
        %v759 = vpop.f32.mrb[0].mxu0
        %v760 = vadd.f32 0.0, %v759
        %v761 = vpop.f32.mrb[0].mxu0
        %762 = vmatprep.mubr.bf16.mxu0 0
        %763 = vmatmul.mubr.bf16.gmra.mrb[0].mxu0 %v630
        %v764 = vpop.f32.mrb[0].mxu0
        %v765 = vadd.f32 0.0, %v764
        %v766 = vpop.f32.mrb[0].mxu0
        %v767 = vpop.f32.mrb[0].mxu0
        %v768 = vadd.f32 0.0, %v767
        %v769 = vpop.f32.mrb[0].mxu0
        %770 = vmatprep.mubr.bf16.mxu0 0
        %771 = vmatmul.mubr.bf16.gmra.mrb[0].mxu0 %v631
        %v772 = vpop.f32.mrb[0].mxu0
        %v773 = vadd.f32 0.0, %v772
        %v774 = vpop.f32.mrb[0].mxu0
        %v775 = vpop.f32.mrb[0].mxu0
        %v776 = vadd.f32 0.0, %v775
        %v777 = vpop.f32.mrb[0].mxu0
        %778 = vmatprep.mubr.bf16.mxu0 0
        %779 = vmatmul.mubr.bf16.gmra.mrb[0].mxu0 %v632
        %v780 = vpop.f32.mrb[0].mxu0
        %v781 = vadd.f32 0.0, %v780
        %v782 = vpop.f32.mrb[0].mxu0
        %v783 = vpop.f32.mrb[0].mxu0
        %v784 = vadd.f32 0.0, %v783
        %v785 = vpop.f32.mrb[0].mxu0
        %786 = vmatprep.mubr.bf16.mxu0 0
        %787 = vmatmul.mubr.bf16.gmra.mrb[0].mxu0 %v633
        %v788 = vpop.f32.mrb[0].mxu0
        %v789 = vadd.f32 0.0, %v788
        %v790 = vpop.f32.mrb[0].mxu0
        %v791 = vpop.f32.mrb[0].mxu0
        %v792 = vadd.f32 0.0, %v791
        %v793 = vpop.f32.mrb[0].mxu0
        %794 = vdwg.mxu0
        %v795 = vmax.f32 %v733, 0.0
        %v796 = vmax.f32 %v736, 0.0
        %v797 = vmax.f32 %v741, 0.0
        %v798 = vmax.f32 %v744, 0.0
        %v799 = vmax.f32 %v749, 0.0
        %v800 = vmax.f32 %v752, 0.0
        %v801 = vmax.f32 %v757, 0.0
        %v802 = vmax.f32 %v760, 0.0
        %v803 = vmax.f32 %v765, 0.0
        %v804 = vmax.f32 %v768, 0.0
        %v805 = vmax.f32 %v773, 0.0
        %v806 = vmax.f32 %v776, 0.0
        %v807 = vmax.f32 %v781, 0.0
        %v808 = vmax.f32 %v784, 0.0
        %v809 = vmax.f32 %v789, 0.0
        %v810 = vmax.f32 %v792, 0.0
        %v811 = vadd.f32 %v425, %v795
        %v812 = vadd.f32 %v426, %v796
        %v813 = vadd.f32 %v427, %v797
        %v814 = vadd.f32 %v428, %v798
        %v815 = vadd.f32 %v429, %v799
        %v816 = vadd.f32 %v430, %v800
        %v817 = vadd.f32 %v431, %v801
        %v818 = vadd.f32 %v432, %v802
        %v819 = vadd.f32 %v433, %v803
        %v820 = vadd.f32 %v434, %v804
        %v821 = vadd.f32 %v435, %v805
        %v822 = vadd.f32 %v436, %v806
        %v823 = vadd.f32 %v437, %v807
        %v824 = vadd.f32 %v438, %v808
        %v825 = vadd.f32 %v439, %v809
        %v826 = vadd.f32 %v440, %v810
        %v827 = vpack.c.bf16 %v812, %v811
        %v828 = vpack.c.bf16 %v814, %v813
        %v829 = vpack.c.bf16 %v816, %v815
        %v830 = vpack.c.bf16 %v818, %v817
        %v831 = vpack.c.bf16 %v820, %v819
        %v832 = vpack.c.bf16 %v822, %v821
        %v833 = vpack.c.bf16 %v824, %v823
        %v834 = vpack.c.bf16 %v826, %v825
        %s835 = scalar_lea.vmem %s2, 64
        %v836 = vld [vmem:[%s835] sm:$0xf]
        %v837 = vld [vmem:[%s835 + $0x4] sm:$0xf]
        %v838 = vld [vmem:[%s835 + $0x8] sm:$0xf]
        %v839 = vld [vmem:[%s835 + $0xc] sm:$0xf]
        %v840 = vld [vmem:[%s835 + $0x10] sm:$0xf]
        %v841 = vld [vmem:[%s835 + $0x14] sm:$0xf]
        %v842 = vld [vmem:[%s835 + $0x18] sm:$0xf]
        %v843 = vld [vmem:[%s835 + $0x1c] sm:$0xf]
        %v844 = vld [vmem:[%s835 + $0x20] sm:$0xf]
        %v845 = vld [vmem:[%s835 + $0x24] sm:$0xf]
        %v846 = vld [vmem:[%s835 + $0x28] sm:$0xf]
        %v847 = vld [vmem:[%s835 + $0x2c] sm:$0xf]
        %v848 = vld [vmem:[%s835 + $0x30] sm:$0xf]
        %v849 = vld [vmem:[%s835 + $0x34] sm:$0xf]
        %v850 = vld [vmem:[%s835 + $0x38] sm:$0xf]
        %v851 = vld [vmem:[%s835 + $0x3c] sm:$0xf]
        %v868 = vunpack.c.l.b16 %v836
        %v869 = vunpack.c.l.b16 %v837
        %v870 = vunpack.c.l.b16 %v838
        %v871 = vunpack.c.l.b16 %v839
        %v872 = vunpack.c.l.b16 %v840
        %v873 = vunpack.c.l.b16 %v841
        %v874 = vunpack.c.l.b16 %v842
        %v875 = vunpack.c.l.b16 %v843
        %v876 = vunpack.c.l.b16 %v844
        %v877 = vunpack.c.l.b16 %v845
        %v878 = vunpack.c.l.b16 %v846
        %v879 = vunpack.c.l.b16 %v847
        %v880 = vunpack.c.l.b16 %v848
        %v881 = vunpack.c.l.b16 %v849
        %v882 = vunpack.c.l.b16 %v850
        %v883 = vunpack.c.l.b16 %v851
        %v884 = vpack.c.b16 %v869, %v868
        %v885 = vpack.c.b16 %v871, %v870
        %v886 = vpack.c.b16 %v873, %v872
        %v887 = vpack.c.b16 %v875, %v874
        %v888 = vpack.c.b16 %v877, %v876
        %v889 = vpack.c.b16 %v879, %v878
        %v890 = vpack.c.b16 %v881, %v880
        %v891 = vpack.c.b16 %v883, %v882
        %900 = vmatprep.subr.bf16.mxu0 0
        %901 = vmatpush1.bf16.msra.mxu0 %v884
        %902 = vmatprep.subr.bf16.mxu0 0
        %903 = vmatpush1.bf16.msra.mxu0 %v885
        %904 = vmatprep.subr.bf16.mxu0 0
        %905 = vmatpush1.bf16.msra.mxu0 %v886
        %906 = vmatprep.subr.bf16.mxu0 0
        %907 = vmatpush1.bf16.msra.mxu0 %v887
        %908 = vmatprep.subr.bf16.mxu0 0
        %909 = vmatpush1.bf16.msra.mxu0 %v888
        %910 = vmatprep.subr.bf16.mxu0 0
        %911 = vmatpush1.bf16.msra.mxu0 %v889
        %912 = vmatprep.subr.bf16.mxu0 0
        %913 = vmatpush1.bf16.msra.mxu0 %v890
        %914 = vmatprep.subr.bf16.mxu0 0
        %915 = vmatpush1.bf16.msra.mxu0 %v891
        %916 = vmatprep.subr.bf16.mxu0 0
        %917 = vmatpush1.bf16.msra.mxu0 0
        %918 = vmatprep.subr.bf16.mxu0 0
        %919 = vmatpush1.bf16.msra.mxu0 0
        %920 = vmatprep.subr.bf16.mxu0 0
        %921 = vmatpush1.bf16.msra.mxu0 0
        %922 = vmatprep.subr.bf16.mxu0 0
        %923 = vmatpush1.bf16.msra.mxu0 0
        %924 = vmatprep.subr.bf16.mxu0 0
        %925 = vmatpush1.bf16.msra.mxu0 0
        %926 = vmatprep.subr.bf16.mxu0 0
        %927 = vmatpush1.bf16.msra.mxu0 0
        %928 = vmatprep.subr.bf16.mxu0 0
        %929 = vmatpush1.bf16.msra.mxu0 0
        %930 = vmatprep.subr.bf16.mxu0 0
        %931 = vmatpush1.bf16.msra.mxu0 0
        %932 = vmatprep.mubr.bf16.mxu0 0
        %933 = vmatmul.mubr.bf16.gmra.mrb[0].mxu0 %v827
        %v934 = vpop.f32.mrb[0].mxu0
        %v935 = vadd.f32 0.0, %v934
        %v936 = vpop.f32.mrb[0].mxu0
        %v937 = vpop.f32.mrb[0].mxu0
        %v938 = vadd.f32 0.0, %v937
        %v939 = vpop.f32.mrb[0].mxu0
        %940 = vmatprep.mubr.bf16.mxu0 0
        %941 = vmatmul.mubr.bf16.gmra.mrb[0].mxu0 %v828
        %v942 = vpop.f32.mrb[0].mxu0
        %v943 = vadd.f32 0.0, %v942
        %v944 = vpop.f32.mrb[0].mxu0
        %v945 = vpop.f32.mrb[0].mxu0
        %v946 = vadd.f32 0.0, %v945
        %v947 = vpop.f32.mrb[0].mxu0
        %948 = vmatprep.mubr.bf16.mxu0 0
        %949 = vmatmul.mubr.bf16.gmra.mrb[0].mxu0 %v829
        %v950 = vpop.f32.mrb[0].mxu0
        %v951 = vadd.f32 0.0, %v950
        %v952 = vpop.f32.mrb[0].mxu0
        %v953 = vpop.f32.mrb[0].mxu0
        %v954 = vadd.f32 0.0, %v953
        %v955 = vpop.f32.mrb[0].mxu0
        %956 = vmatprep.mubr.bf16.mxu0 0
        %957 = vmatmul.mubr.bf16.gmra.mrb[0].mxu0 %v830
        %v958 = vpop.f32.mrb[0].mxu0
        %v959 = vadd.f32 0.0, %v958
        %v960 = vpop.f32.mrb[0].mxu0
        %v961 = vpop.f32.mrb[0].mxu0
        %v962 = vadd.f32 0.0, %v961
        %v963 = vpop.f32.mrb[0].mxu0
        %964 = vmatprep.mubr.bf16.mxu0 0
        %965 = vmatmul.mubr.bf16.gmra.mrb[0].mxu0 %v831
        %v966 = vpop.f32.mrb[0].mxu0
        %v967 = vadd.f32 0.0, %v966
        %v968 = vpop.f32.mrb[0].mxu0
        %v969 = vpop.f32.mrb[0].mxu0
        %v970 = vadd.f32 0.0, %v969
        %v971 = vpop.f32.mrb[0].mxu0
        %972 = vmatprep.mubr.bf16.mxu0 0
        %973 = vmatmul.mubr.bf16.gmra.mrb[0].mxu0 %v832
        %v974 = vpop.f32.mrb[0].mxu0
        %v975 = vadd.f32 0.0, %v974
        %v976 = vpop.f32.mrb[0].mxu0
        %v977 = vpop.f32.mrb[0].mxu0
        %v978 = vadd.f32 0.0, %v977
        %v979 = vpop.f32.mrb[0].mxu0
        %980 = vmatprep.mubr.bf16.mxu0 0
        %981 = vmatmul.mubr.bf16.gmra.mrb[0].mxu0 %v833
        %v982 = vpop.f32.mrb[0].mxu0
        %v983 = vadd.f32 0.0, %v982
        %v984 = vpop.f32.mrb[0].mxu0
        %v985 = vpop.f32.mrb[0].mxu0
        %v986 = vadd.f32 0.0, %v985
        %v987 = vpop.f32.mrb[0].mxu0
        %988 = vmatprep.mubr.bf16.mxu0 0
        %989 = vmatmul.mubr.bf16.gmra.mrb[0].mxu0 %v834
        %v990 = vpop.f32.mrb[0].mxu0
        %v991 = vadd.f32 0.0, %v990
        %v992 = vpop.f32.mrb[0].mxu0
        %v993 = vpop.f32.mrb[0].mxu0
        %v994 = vadd.f32 0.0, %v993
        %v995 = vpop.f32.mrb[0].mxu0
        %996 = vdwg.mxu0
        %v997 = vmax.f32 %v935, 0.0
        %v998 = vmax.f32 %v938, 0.0
        %v999 = vmax.f32 %v943, 0.0
        %v1000 = vmax.f32 %v946, 0.0
        %v1001 = vmax.f32 %v951, 0.0
        %v1002 = vmax.f32 %v954, 0.0
        %v1003 = vmax.f32 %v959, 0.0
        %v1004 = vmax.f32 %v962, 0.0
        %v1005 = vmax.f32 %v967, 0.0
        %v1006 = vmax.f32 %v970, 0.0
        %v1007 = vmax.f32 %v975, 0.0
        %v1008 = vmax.f32 %v978, 0.0
        %v1009 = vmax.f32 %v983, 0.0
        %v1010 = vmax.f32 %v986, 0.0
        %v1011 = vmax.f32 %v991, 0.0
        %v1012 = vmax.f32 %v994, 0.0
        %v1013 = vpack.c.bf16 %v998, %v997
        %v1014 = vpack.c.bf16 %v1000, %v999
        %v1015 = vpack.c.bf16 %v1002, %v1001
        %v1016 = vpack.c.bf16 %v1004, %v1003
        %v1017 = vpack.c.bf16 %v1006, %v1005
        %v1018 = vpack.c.bf16 %v1008, %v1007
        %v1019 = vpack.c.bf16 %v1010, %v1009
        %v1020 = vpack.c.bf16 %v1012, %v1011
        %s1021 = scalar_lea.vmem [#allocation2], 64
        %v1022 = vld [vmem:[%s1021] sm:$0xf]
        %v1023 = vld [vmem:[%s1021 + $0x4] sm:$0xf]
        %v1024 = vld [vmem:[%s1021 + $0x8] sm:$0xf]
        %v1025 = vld [vmem:[%s1021 + $0xc] sm:$0xf]
        %v1026 = vld [vmem:[%s1021 + $0x10] sm:$0xf]
        %v1027 = vld [vmem:[%s1021 + $0x14] sm:$0xf]
        %v1028 = vld [vmem:[%s1021 + $0x18] sm:$0xf]
        %v1029 = vld [vmem:[%s1021 + $0x1c] sm:$0xf]
        %v1030 = vld [vmem:[%s1021 + $0x20] sm:$0xf]
        %v1031 = vld [vmem:[%s1021 + $0x24] sm:$0xf]
        %v1032 = vld [vmem:[%s1021 + $0x28] sm:$0xf]
        %v1033 = vld [vmem:[%s1021 + $0x2c] sm:$0xf]
        %v1034 = vld [vmem:[%s1021 + $0x30] sm:$0xf]
        %v1035 = vld [vmem:[%s1021 + $0x34] sm:$0xf]
        %v1036 = vld [vmem:[%s1021 + $0x38] sm:$0xf]
        %v1037 = vld [vmem:[%s1021 + $0x3c] sm:$0xf]
        %v1054 = vunpack.c.l.b16 %v1022
        %v1055 = vunpack.c.l.b16 %v1023
        %v1056 = vunpack.c.l.b16 %v1024
        %v1057 = vunpack.c.l.b16 %v1025
        %v1058 = vunpack.c.l.b16 %v1026
        %v1059 = vunpack.c.l.b16 %v1027
        %v1060 = vunpack.c.l.b16 %v1028
        %v1061 = vunpack.c.l.b16 %v1029
        %v1062 = vunpack.c.l.b16 %v1030
        %v1063 = vunpack.c.l.b16 %v1031
        %v1064 = vunpack.c.l.b16 %v1032
        %v1065 = vunpack.c.l.b16 %v1033
        %v1066 = vunpack.c.l.b16 %v1034
        %v1067 = vunpack.c.l.b16 %v1035
        %v1068 = vunpack.c.l.b16 %v1036
        %v1069 = vunpack.c.l.b16 %v1037
        %v1070 = vpack.c.b16 %v1055, %v1054
        %v1071 = vpack.c.b16 %v1057, %v1056
        %v1072 = vpack.c.b16 %v1059, %v1058
        %v1073 = vpack.c.b16 %v1061, %v1060
        %v1074 = vpack.c.b16 %v1063, %v1062
        %v1075 = vpack.c.b16 %v1065, %v1064
        %v1076 = vpack.c.b16 %v1067, %v1066
        %v1077 = vpack.c.b16 %v1069, %v1068
        %1086 = vmatprep.subr.bf16.mxu0 0
        %1087 = vmatpush1.bf16.msra.mxu0 %v1070
        %1088 = vmatprep.subr.bf16.mxu0 0
        %1089 = vmatpush1.bf16.msra.mxu0 %v1071
        %1090 = vmatprep.subr.bf16.mxu0 0
        %1091 = vmatpush1.bf16.msra.mxu0 %v1072
        %1092 = vmatprep.subr.bf16.mxu0 0
        %1093 = vmatpush1.bf16.msra.mxu0 %v1073
        %1094 = vmatprep.subr.bf16.mxu0 0
        %1095 = vmatpush1.bf16.msra.mxu0 %v1074
        %1096 = vmatprep.subr.bf16.mxu0 0
        %1097 = vmatpush1.bf16.msra.mxu0 %v1075
        %1098 = vmatprep.subr.bf16.mxu0 0
        %1099 = vmatpush1.bf16.msra.mxu0 %v1076
        %1100 = vmatprep.subr.bf16.mxu0 0
        %1101 = vmatpush1.bf16.msra.mxu0 %v1077
        %1102 = vmatprep.subr.bf16.mxu0 0
        %1103 = vmatpush1.bf16.msra.mxu0 0
        %1104 = vmatprep.subr.bf16.mxu0 0
        %1105 = vmatpush1.bf16.msra.mxu0 0
        %1106 = vmatprep.subr.bf16.mxu0 0
        %1107 = vmatpush1.bf16.msra.mxu0 0
        %1108 = vmatprep.subr.bf16.mxu0 0
        %1109 = vmatpush1.bf16.msra.mxu0 0
        %1110 = vmatprep.subr.bf16.mxu0 0
        %1111 = vmatpush1.bf16.msra.mxu0 0
        %1112 = vmatprep.subr.bf16.mxu0 0
        %1113 = vmatpush1.bf16.msra.mxu0 0
        %1114 = vmatprep.subr.bf16.mxu0 0
        %1115 = vmatpush1.bf16.msra.mxu0 0
        %1116 = vmatprep.subr.bf16.mxu0 0
        %1117 = vmatpush1.bf16.msra.mxu0 0
        %1118 = vmatprep.mubr.bf16.mxu0 0
        %1119 = vmatmul.mubr.bf16.gmra.mrb[0].mxu0 %v1013
        %v1120 = vpop.f32.mrb[0].mxu0
        %v1121 = vadd.f32 0.0, %v1120
        %v1122 = vpop.f32.mrb[0].mxu0
        %v1123 = vpop.f32.mrb[0].mxu0
        %v1124 = vadd.f32 0.0, %v1123
        %v1125 = vpop.f32.mrb[0].mxu0
        %1126 = vmatprep.mubr.bf16.mxu0 0
        %1127 = vmatmul.mubr.bf16.gmra.mrb[0].mxu0 %v1014
        %v1128 = vpop.f32.mrb[0].mxu0
        %v1129 = vadd.f32 0.0, %v1128
        %v1130 = vpop.f32.mrb[0].mxu0
        %v1131 = vpop.f32.mrb[0].mxu0
        %v1132 = vadd.f32 0.0, %v1131
        %v1133 = vpop.f32.mrb[0].mxu0
        %1134 = vmatprep.mubr.bf16.mxu0 0
        %1135 = vmatmul.mubr.bf16.gmra.mrb[0].mxu0 %v1015
        %v1136 = vpop.f32.mrb[0].mxu0
        %v1137 = vadd.f32 0.0, %v1136
        %v1138 = vpop.f32.mrb[0].mxu0
        %v1139 = vpop.f32.mrb[0].mxu0
        %v1140 = vadd.f32 0.0, %v1139
        %v1141 = vpop.f32.mrb[0].mxu0
        %1142 = vmatprep.mubr.bf16.mxu0 0
        %1143 = vmatmul.mubr.bf16.gmra.mrb[0].mxu0 %v1016
        %v1144 = vpop.f32.mrb[0].mxu0
        %v1145 = vadd.f32 0.0, %v1144
        %v1146 = vpop.f32.mrb[0].mxu0
        %v1147 = vpop.f32.mrb[0].mxu0
        %v1148 = vadd.f32 0.0, %v1147
        %v1149 = vpop.f32.mrb[0].mxu0
        %1150 = vmatprep.mubr.bf16.mxu0 0
        %1151 = vmatmul.mubr.bf16.gmra.mrb[0].mxu0 %v1017
        %v1152 = vpop.f32.mrb[0].mxu0
        %v1153 = vadd.f32 0.0, %v1152
        %v1154 = vpop.f32.mrb[0].mxu0
        %v1155 = vpop.f32.mrb[0].mxu0
        %v1156 = vadd.f32 0.0, %v1155
        %v1157 = vpop.f32.mrb[0].mxu0
        %1158 = vmatprep.mubr.bf16.mxu0 0
        %1159 = vmatmul.mubr.bf16.gmra.mrb[0].mxu0 %v1018
        %v1160 = vpop.f32.mrb[0].mxu0
        %v1161 = vadd.f32 0.0, %v1160
        %v1162 = vpop.f32.mrb[0].mxu0
        %v1163 = vpop.f32.mrb[0].mxu0
        %v1164 = vadd.f32 0.0, %v1163
        %v1165 = vpop.f32.mrb[0].mxu0
        %1166 = vmatprep.mubr.bf16.mxu0 0
        %1167 = vmatmul.mubr.bf16.gmra.mrb[0].mxu0 %v1019
        %v1168 = vpop.f32.mrb[0].mxu0
        %v1169 = vadd.f32 0.0, %v1168
        %v1170 = vpop.f32.mrb[0].mxu0
        %v1171 = vpop.f32.mrb[0].mxu0
        %v1172 = vadd.f32 0.0, %v1171
        %v1173 = vpop.f32.mrb[0].mxu0
        %1174 = vmatprep.mubr.bf16.mxu0 0
        %1175 = vmatmul.mubr.bf16.gmra.mrb[0].mxu0 %v1020
        %v1176 = vpop.f32.mrb[0].mxu0
        %v1177 = vadd.f32 0.0, %v1176
        %v1178 = vpop.f32.mrb[0].mxu0
        %v1179 = vpop.f32.mrb[0].mxu0
        %v1180 = vadd.f32 0.0, %v1179
        %v1181 = vpop.f32.mrb[0].mxu0
        %1182 = vdwg.mxu0
        %v1183 = vmax.f32 %v1121, 0.0
        %v1184 = vmax.f32 %v1124, 0.0
        %v1185 = vmax.f32 %v1129, 0.0
        %v1186 = vmax.f32 %v1132, 0.0
        %v1187 = vmax.f32 %v1137, 0.0
        %v1188 = vmax.f32 %v1140, 0.0
        %v1189 = vmax.f32 %v1145, 0.0
        %v1190 = vmax.f32 %v1148, 0.0
        %v1191 = vmax.f32 %v1153, 0.0
        %v1192 = vmax.f32 %v1156, 0.0
        %v1193 = vmax.f32 %v1161, 0.0
        %v1194 = vmax.f32 %v1164, 0.0
        %v1195 = vmax.f32 %v1169, 0.0
        %v1196 = vmax.f32 %v1172, 0.0
        %v1197 = vmax.f32 %v1177, 0.0
        %v1198 = vmax.f32 %v1180, 0.0
        %v1199 = vadd.f32 %v811, %v1183
        %v1200 = vadd.f32 %v812, %v1184
        %v1201 = vadd.f32 %v813, %v1185
        %v1202 = vadd.f32 %v814, %v1186
        %v1203 = vadd.f32 %v815, %v1187
        %v1204 = vadd.f32 %v816, %v1188
        %v1205 = vadd.f32 %v817, %v1189
        %v1206 = vadd.f32 %v818, %v1190
        %v1207 = vadd.f32 %v819, %v1191
        %v1208 = vadd.f32 %v820, %v1192
        %v1209 = vadd.f32 %v821, %v1193
        %v1210 = vadd.f32 %v822, %v1194
        %v1211 = vadd.f32 %v823, %v1195
        %v1212 = vadd.f32 %v824, %v1196
        %v1213 = vadd.f32 %v825, %v1197
        %v1214 = vadd.f32 %v826, %v1198
        %1215 = vst [vmem:[%s206] sm:$0xff] %v1199
        %1216 = vst [vmem:[%s206 + $0x8] sm:$0xff] %v1200
        %1217 = vst [vmem:[%s206 + $0x10] sm:$0xff] %v1201
        %1218 = vst [vmem:[%s206 + $0x18] sm:$0xff] %v1202
        %1219 = vst [vmem:[%s206 + $0x20] sm:$0xff] %v1203
        %1220 = vst [vmem:[%s206 + $0x28] sm:$0xff] %v1204
        %1221 = vst [vmem:[%s206 + $0x30] sm:$0xff] %v1205
        %1222 = vst [vmem:[%s206 + $0x38] sm:$0xff] %v1206
        %1223 = vst [vmem:[%s206 + $0x40] sm:$0xff] %v1207
        %1224 = vst [vmem:[%s206 + $0x48] sm:$0xff] %v1208
        %1225 = vst [vmem:[%s206 + $0x50] sm:$0xff] %v1209
        %1226 = vst [vmem:[%s206 + $0x58] sm:$0xff] %v1210
        %1227 = vst [vmem:[%s206 + $0x60] sm:$0xff] %v1211
        %1228 = vst [vmem:[%s206 + $0x68] sm:$0xff] %v1212
        %1229 = vst [vmem:[%s206 + $0x70] sm:$0xff] %v1213
        %1230 = vst [vmem:[%s206 + $0x78] sm:$0xff] %v1214
        %s1231 = sand.u32 %s116, 1
        %s1232 = scalar_lea.sflag [#allocation4], %s1231
        %s1233 = sand.u32 %s116, 1
        %s1234 = smul.addr %s1233, 128
        %s1235 = scalar_lea.vmem [#allocation5], %s1234
        // Predicated region
        $region41: #{tpu_custom_call.1} parent=35 // pred_check
          %p1236 = pneg %p126
        $region42: #{tpu_custom_call.1} parent=35 // pred_check_branch
          %1238 = sbr.rel (%p1236) target = $region44
        $region43: #{tpu_custom_call.1} parent=35 // pred_region
          %s1239 = smul.u32 16, %s19
          %s1241 = ssub.s32 2048, 2048
          %1242 = vsyncadd %s1232, %s1241
          %s1243 = smul.addr %s1239, 128
          %s1244 = scalar_lea.hbm %s4, %s1243
          %s1245 = sshll.u32 %s1235, 4
          %s1246 = int_to_ptr.vmem [resolvable:$true] %s1245
          %1251 = dma.vmem_to_hbm [thread:$0]  %s1246, 2048, %s1244, %s1232, 128, 128, 8
        $region44: #{tpu_custom_call.1} parent=35 // pred_fallthru
          _
      $region36: #{tpu_custom_call.1} parent=5 // pred_fallthru
        _
      %p1252 = scmp.le.s32.totalorder 2, %s14
      // Predicated region
      $region45: #{tpu_custom_call.1} parent=5 // pred_check
        %p1253 = pneg %p1252
      $region46: #{tpu_custom_call.1} parent=5 // pred_check_branch
        %1255 = sbr.rel (%p1253) target = $region48
      $region47: #{tpu_custom_call.1} parent=5 // pred_region
        %s1256 = ssub.s32 %s14, 2
        // Predicated region
        $region49: #{tpu_custom_call.1} parent=47 // pred_check
          %p1257 = pneg %p132
        $region50: #{tpu_custom_call.1} parent=47 // pred_check_branch
          %1259 = sbr.rel (%p1257) target = $region52
        $region51: #{tpu_custom_call.1} parent=47 // pred_region
          %s1260 = sand.u32 %s117, 1
          %s1261 = scalar_lea.sflag [#allocation4], %s1260
          %s1262 = sand.u32 %s117, 1
          %s1263 = smul.addr %s1262, 128
          %s1264 = scalar_lea.vmem [#allocation5], %s1263
          %1265 = dma.done %s1261, 2048
        $region52: #{tpu_custom_call.1} parent=47 // pred_fallthru
          _
      $region48: #{tpu_custom_call.1} parent=5 // pred_fallthru
        _
    $region6: #{tpu_custom_call.1} parent=1 // loop_footer
      %s18 = sadd.s32 1, %s14
    $region7: #{tpu_custom_call.1} parent=1 // loop_footer_branch
      %13 = sbr.rel target = $region3
    $region8: #{tpu_custom_call.1} parent=1 // loop_exit
      _
    %1266 = vsyncpa [#allocation3], 1
    %s1267 = scalar_lea.sflag [#allocation3], 1
    %1268 = vsyncpa %s1267, 1
    %1269 = vsyncpa [#allocation4], 1
    %s1270 = scalar_lea.sflag [#allocation4], 1
    %1271 = vsyncpa %s1270, 1

</llo_original>
